<compile_context>
chip_gen: v5e
topology: v5e:2x2
jax: 0.10.0
libtpu: 0.0.40
codegen_flags: <defaults>
</compile_context>

<pallas_src>
import functools

import jax
import jax.numpy as jnp
from jax.experimental import pallas as pl
from jax.experimental.pallas import tpu as pltpu


# ---------------------------------------------------------------------------
# Lazy pltpu.roll rotation-direction probe (first call only, cached; never at
# import time).  The im2col taps need out[:, p] = in[:, p + delta]; under the
# np.roll convention (out[i] = in[i - shift]) that is shift = -delta.
# ---------------------------------------------------------------------------
_ROLL_SIGN_CACHE = []


def _roll_sign():
    if not _ROLL_SIGN_CACHE:
        def probe(x_ref, o_ref):
            o_ref[...] = pltpu.roll(x_ref[...], 1, axis=1)

        with jax.ensure_compile_time_eval():
            x = jnp.tile(jnp.arange(128, dtype=jnp.float32)[None, :], (8, 1))
            y = pl.pallas_call(
                probe, out_shape=jax.ShapeDtypeStruct((8, 128), jnp.float32))(x)
            first = float(y[0, 0])
        if first == 127.0:      # np.roll convention: out[i] = in[(i - shift) % n]
            _ROLL_SIGN_CACHE.append(-1)
        elif first == 1.0:      # opposite convention: out[i] = in[(i + shift) % n]
            _ROLL_SIGN_CACHE.append(1)
        else:
            raise RuntimeError(f"unexpected pltpu.roll behaviour: out[0,0]={first}")
    return _ROLL_SIGN_CACHE[0]


# ---------------------------------------------------------------------------
# Fused kernel: BN1+ReLU -> 1x1 conv (BN2 scale folded in) -> +b2, ReLU ->
# 3x3 SAME conv (no bias).  One grid step processes `nb` images on-chip.
# ---------------------------------------------------------------------------
def _fused_dense_layer_kernel(x_ref, s1_ref, b1_ref, w1_ref, b2_ref, w2_ref,
                              o_ref, patch_ref, *, H, W, nb, roll_sign):
    Cin = x_ref.shape[1]
    Cmid = w1_ref.shape[0]
    HW = H * W

    # ---- hoisted once per grid step (JAX does not CSE broadcast_in_dim) ----
    w1 = w1_ref[...]                                   # (Cmid, Cin) bf16, s2-folded
    w2 = w2_ref[...]                                   # (Cout, 9*Cmid) bf16
    s1 = jnp.broadcast_to(s1_ref[...], (Cin, HW))      # BN1 scale
    b1 = jnp.broadcast_to(b1_ref[...], (Cin, HW))      # BN1 shift
    b2 = jnp.broadcast_to(b2_ref[...], (Cmid, HW))     # BN2 shift (scale folded)

    # In-kernel 3x3 SAME-padding halo masks from an iota over the row-major
    # flattened spatial index.  Center tap (t == 4) is all-ones -> no mask.
    p = jax.lax.broadcasted_iota(jnp.int32, (1, HW), 1)
    row = p // W
    col = p - row * W
    masks = []
    for ky in range(3):
        for kx in range(3):
            if ky == 1 and kx == 1:
                masks.append(None)
                continue
            vy = jnp.logical_and(row + (ky - 1) >= 0, row + (ky - 1) < H)
            vx = jnp.logical_and(col + (kx - 1) >= 0, col + (kx - 1) < W)
            masks.append(jnp.logical_and(vy, vx))      # (1, HW) bool

    zero_bf16 = jnp.zeros((), jnp.bfloat16)

    def per_image(i, carry):
        # ---- BN1 + ReLU (channels-first; (C,1) affine along lanes) --------
        a1 = jnp.maximum(x_ref[i] * s1 + b1, 0.0)                     # (Cin, HW) f32
        # ---- 1x1 conv == channel matmul; BN2 scale already in w1 ----------
        h = jnp.dot(w1, a1.astype(jnp.bfloat16),
                    preferred_element_type=jnp.float32)               # (Cmid, HW) f32
        # ---- BN2 shift + ReLU ----------------------------------------------
        a2 = jnp.maximum(h + b2, 0.0)                                 # (Cmid, HW) f32

        # ---- im2col: nine lane-rotated taps, halo zeroed, bf16 stores -------
        # Tap (ky,kx) needs a2[:, p + (ky-1)*W + (kx-1)]; wrapping lanes are
        # zeroed by the halo masks.
        # TODO(synk): roll a2 in bf16 once packed-dtype lane rotation is
        #             guaranteed on all toolchains (halves the XLU roll work).
        for ky in range(3):
            for kx in range(3):
                t = ky * 3 + kx
                delta = (ky - 1) * W + (kx - 1)
                shift = (roll_sign * delta) % HW
                tap = a2 if shift == 0 else pltpu.roll(a2, shift, axis=1)
                tap = tap.astype(jnp.bfloat16)
                if masks[t] is not None:
                    tap = jnp.where(masks[t], tap, zero_bf16)
                patch_ref[t * Cmid:(t + 1) * Cmid, :] = tap

        # ---- single K = 9*Cmid MXU matmul; lane-dense (Cout, HW) store ------
        o_ref[i] = jnp.dot(w2, patch_ref[...],
                           preferred_element_type=jnp.float32)
        return carry

    jax.lax.fori_loop(0, nb, per_image, 0, unroll=True)


def _pick_images_per_step(N, Cin, Cmid, Cout, HW, max_nb=8,
                          vmem_budget_bytes=24 * 1024 * 1024):
    """Largest nb | N (capped) whose double-buffered blocks fit the budget."""
    per_image = 2 * 4 * HW * (Cin + Cout)              # x/out blocks, f32, 2 bufs
    fixed = (2 * 9 * Cmid * HW                         # bf16 im2col patch scratch
             + 2 * 2 * (Cmid * Cin + Cout * 9 * Cmid)  # bf16 weights, 2 bufs
             + 4 * HW * (2 * Cin + 3 * Cmid))          # a1/h/a2 + bcast intermediates
    best = 1
    for nb in range(1, min(N, max_nb) + 1):
        if N % nb == 0 and fixed + nb * per_image <= vmem_budget_bytes:
            best = nb
    return best


# ---------------------------------------------------------------------------
# Wrapper: PCQDenseLayer.forward(input, external_range)
# ---------------------------------------------------------------------------
def pcq_dense_layer_forward(prev_features, params, external_range=None):
    """prev_features: NCHW array or list of NCHW arrays (concatenated on C)."""
    del external_range  # TODO(synk): qparam/EMA bookkeeping only; no FP effect.
    if not isinstance(prev_features, (list, tuple)):
        prev_features = [prev_features]
    x = jnp.concatenate(prev_features, axis=1).astype(jnp.float32)    # NCHW
    N, Cin, H, W = x.shape
    HW = H * W
    eps = 1e-5

    # Folded BN affines (computed once, outside the kernel).
    s1 = params["bn1_gamma"] / jnp.sqrt(params["bn1_var"] + eps)
    b1 = params["bn1_beta"] - params["bn1_mean"] * s1
    s2 = params["bn2_gamma"] / jnp.sqrt(params["bn2_var"] + eps)
    b2 = params["bn2_beta"] - params["bn2_mean"] * s2

    # conv1 weight (Cmid, Cin, 1, 1) -> (Cmid, Cin), BN2 scale folded in:
    # ReLU(s2*(w1@a1)+b2) == ReLU(((s2[:,None]*w1)@a1)+b2).
    w1 = params["conv1_w"].reshape(params["conv1_w"].shape[0], Cin)
    Cmid = w1.shape[0]
    w1_folded = (w1 * s2[:, None]).astype(jnp.bfloat16)

    # conv2 weight (Cout, Cmid, 3, 3) -> (Cout, 9*Cmid), K index =
    # (ky*3+kx)*Cmid + c, matching the tap stacking order in the kernel.
    w2 = params["conv2_w"]
    Cout = w2.shape[0]
    w2_flat = jnp.transpose(w2, (0, 2, 3, 1)).reshape(Cout, 9 * Cmid)
    w2_flat = w2_flat.astype(jnp.bfloat16)

    nb = _pick_images_per_step(N, Cin, Cmid, Cout, HW)
    x3 = x.reshape(N, Cin, HW)                                        # free reshape

    kernel = functools.partial(_fused_dense_layer_kernel, H=H, W=W, nb=nb,
                               roll_sign=_roll_sign())
    flops = 2 * N * HW * Cmid * (Cin + 9 * Cout)
    bytes_accessed = (4 * (x3.size + N * Cout * HW + s1.size + b1.size + b2.size)
                      + 2 * (w1_folded.size + w2_flat.size))

    out3 = pl.pallas_call(
        kernel,
        out_shape=jax.ShapeDtypeStruct((N, Cout, HW), jnp.float32),
        grid_spec=pltpu.PrefetchScalarGridSpec(
            num_scalar_prefetch=0,
            grid=(N // nb,),
            in_specs=[
                pl.BlockSpec((nb, Cin, HW), lambda n: (n, 0, 0)),      # x
                pl.BlockSpec((Cin, 1), lambda n: (0, 0)),              # bn1 scale
                pl.BlockSpec((Cin, 1), lambda n: (0, 0)),              # bn1 shift
                pl.BlockSpec((Cmid, Cin), lambda n: (0, 0)),           # w1*s2 (bf16)
                pl.BlockSpec((Cmid, 1), lambda n: (0, 0)),             # bn2 shift
                pl.BlockSpec((Cout, 9 * Cmid), lambda n: (0, 0)),      # w2 (bf16)
            ],
            out_specs=pl.BlockSpec((nb, Cout, HW), lambda n: (n, 0, 0)),
            scratch_shapes=[pltpu.VMEM((9 * Cmid, HW), jnp.bfloat16)],  # im2col patch
        ),
        compiler_params=pltpu.CompilerParams(
            dimension_semantics=("parallel",),
            vmem_limit_bytes=32 * 1024 * 1024),
        cost_estimate=pl.CostEstimate(
            flops=flops, transcendentals=0, bytes_accessed=bytes_accessed),
    )(
        x3,
        s1.reshape(Cin, 1), b1.reshape(Cin, 1),
        w1_folded,
        b2.reshape(Cmid, 1),
        w2_flat,
    )
    return out3.reshape(N, Cout, H, W)                                # NCHW out


# ---------------------------------------------------------------------------
# Pure-XLA reference (bf16 matmul inputs, f32 accum, BN2 NOT folded).
# ---------------------------------------------------------------------------
def ref_forward(x_nchw, params):
    eps = 1e-5
    s1 = params["bn1_gamma"] / jnp.sqrt(params["bn1_var"] + eps)
    b1 = params["bn1_beta"] - params["bn1_mean"] * s1
    a1 = jnp.maximum(x_nchw * s1[None, :, None, None] + b1[None, :, None, None], 0.0)
    h = jax.lax.conv_general_dilated(
        a1.astype(jnp.bfloat16), params["conv1_w"].astype(jnp.bfloat16),
        window_strides=(1, 1), padding="VALID",
        dimension_numbers=("NCHW", "OIHW", "NCHW"),
        preferred_element_type=jnp.float32)
    s2 = params["bn2_gamma"] / jnp.sqrt(params["bn2_var"] + eps)
    b2 = params["bn2_beta"] - params["bn2_mean"] * s2
    a2 = jnp.maximum(h * s2[None, :, None, None] + b2[None, :, None, None], 0.0)
    out = jax.lax.conv_general_dilated(
        a2.astype(jnp.bfloat16), params["conv2_w"].astype(jnp.bfloat16),
        window_strides=(1, 1), padding=((1, 1), (1, 1)),
        dimension_numbers=("NCHW", "OIHW", "NCHW"),
        preferred_element_type=jnp.float32)
    return out


def make_params(key, num_input_features, growth_rate, bn_size):
    cmid = bn_size * growth_rate
    ks = jax.random.split(key, 10)
    u = lambda k, shape: jax.random.uniform(k, shape, jnp.float32, 0.5, 1.5)
    n = lambda k, shape, s=0.1: s * jax.random.normal(k, shape, jnp.float32)
    return {
        "bn1_gamma": u(ks[0], (num_input_features,)),
        "bn1_beta": n(ks[1], (num_input_features,)),
        "bn1_mean": n(ks[2], (num_input_features,)),
        "bn1_var": u(ks[3], (num_input_features,)),
        # conv1: PyTorch weight layout (Cmid, Cin, 1, 1)
        "conv1_w": jax.random.normal(ks[4], (cmid, num_input_features, 1, 1),
                                     jnp.float32) / jnp.sqrt(num_input_features),
        "bn2_gamma": u(ks[5], (cmid,)),
        "bn2_beta": n(ks[6], (cmid,)),
        "bn2_mean": n(ks[7], (cmid,)),
        "bn2_var": u(ks[8], (cmid,)),
        # conv2: PyTorch weight layout (Cout, Cmid, 3, 3)
        "conv2_w": jax.random.normal(ks[9], (growth_rate, cmid, 3, 3),
                                     jnp.float32) / jnp.sqrt(9.0 * cmid),
    }


if __name__ == "__main__":
    # Small DenseNet-like config: num_input_features=8, growth_rate=8, bn_size=4.
    N, Cin, H, W = 2, 8, 16, 16
    growth_rate, bn_size = 8, 4

    key = jax.random.PRNGKey(0)
    kx, kp = jax.random.split(key)
    x = jax.random.normal(kx, (N, Cin, H, W), jnp.float32)       # NCHW, like PyTorch
    params = make_params(kp, Cin, growth_rate, bn_size)
    external_range = jnp.array([[-6.0, 6.0]], jnp.float32)       # qparam bookkeeping only

    out = pcq_dense_layer_forward(x, params, external_range=external_range)
    out = jax.block_until_ready(out)

    ref = jax.block_until_ready(ref_forward(x, params))
    assert out.shape == (N, growth_rate, H, W), out.shape
    max_err = float(jnp.max(jnp.abs(out - ref)))
    # bf16 matmul inputs + BN2 scale folded into the bf16 conv1 weight ->
    # slightly looser tolerance than a pure-f32 check.
    assert jnp.allclose(out, ref, atol=2e-2, rtol=2e-2), max_err

    print("KERNEL_OK")
</pallas_src>

<mosaic_0001>
module attributes {stable_mosaic.version = 11 : i64} {
  func.func @probe(%arg0: memref<8x128xf32, #tpu.memory_space<vmem>>, %arg1: memref<8x128xf32, #tpu.memory_space<vmem>>) attributes {dimension_semantics = [], scalar_prefetch = 0 : i64, scratch_operands = 0 : i64, tpu.core_type = #tpu.core_type<tc>} {
    %c0 = arith.constant 0 : index
    %c0_0 = arith.constant 0 : index
    %0 = vector.load %arg0[%c0, %c0_0] : memref<8x128xf32, #tpu.memory_space<vmem>>, vector<8x128xf32>
    %c1_i32 = arith.constant 1 : i32
    %1 = tpu.dynamic_rotate %0 by %c1_i32 dim 1 : vector<8x128xf32>, i32 -> vector<8x128xf32>
    %c0_1 = arith.constant 0 : index
    %c0_2 = arith.constant 0 : index
    %2 = vector.load %arg1[%c0_1, %c0_2] : memref<8x128xf32, #tpu.memory_space<vmem>>, vector<8x128xf32>
    tpu.vector_store %arg1[%c0_1, %c0_2], %1 {strides = array<i32>} : memref<8x128xf32, #tpu.memory_space<vmem>>, vector<8x128xf32>,
    return
  }
}

</mosaic_0001>

<llo_original>
// kernel: tpu_custom_call.1
$region0: #{tpu_custom_call.1}
  #allocation0 [shape = 'u32[]', space=smem, size = 0x4, offset = 0x4, fixed_abs, tag = 'smem constant byte address 0x4 - core index']
  #allocation1 [shape = 'u32[72,128]{1,0:T(1,128)}', space=vmem, size = 0x9000, scoped, tag = 'internal scratch']
  %s0 = inlined_call_operand.hbm [shape: f32[8,128], index: 0, kind: input, shape index: {}]
  %s1 = inlined_call_operand.hbm [shape: f32[8,128], index: 1, kind: output, shape index: {}]
  %s2 = sld [smem:[#allocation0]]
  $region18: #{tpu_custom_call.1} parent=0
    _
  %s4 = ssub.s32 1, %s2
  %s5 = scalar_select 0, %s4, %s2
  $region1: #{tpu_custom_call.1} parent=0
    #allocation2 [shape = 'u8[4096]{0}', space=vmem, size = 0x1000, scoped, tag = 'input window, operand 0, single buffered']
    #allocation3 [shape = 's32[1]{0}', space=sflag, size = 0x4, scoped, tag = 'scoped memory for tpu_custom_call.1']
    #allocation4 [shape = 's32[1]{0}', space=sflag, size = 0x4, scoped, tag = 'scoped memory for tpu_custom_call.1']
    #allocation5 [shape = 'u8[4096]{0}', space=vmem, size = 0x1000, scoped, tag = 'output window, operand 0, single buffered']
    %6 = vsyncpa [#allocation3], 0
    %7 = vsyncpa [#allocation4], 0
    // Predicated region
    $region2: #{tpu_custom_call.1} parent=1 // pred_check
      _
    $region3: #{tpu_custom_call.1} parent=1 // pred_check_branch
      %9 = sbr.rel (0) target = $region5
    $region4: #{tpu_custom_call.1} parent=1 // pred_region
      %11 = vsyncadd [#allocation3], 0
      %s13 = sshll.u32 %s0, 4
      %s14 = int_to_ptr.hbm [resolvable:$true] %s13
      %s15 = sshll.u32 [#allocation2], 4
      %s16 = int_to_ptr.vmem [resolvable:$true] %s15
      %18 = dma.hbm_to_vmem [thread:$0]  %s14, 128, %s16, [#allocation3]
    $region5: #{tpu_custom_call.1} parent=1 // pred_fallthru
      _
    // Predicated region
    $region6: #{tpu_custom_call.1} parent=1 // pred_check
      _
    $region7: #{tpu_custom_call.1} parent=1 // pred_check_branch
      %20 = sbr.rel (0) target = $region9
    $region8: #{tpu_custom_call.1} parent=1 // pred_region
      %22 = dma.done [#allocation3], 128
    $region9: #{tpu_custom_call.1} parent=1 // pred_fallthru
      _
    %v23 = vld [vmem:[#allocation2] sm:$0xff]
    %24 = vrot.lane.b32.xlu0 %v23, 1
    %v25 = vpop.permute.xlu0 %24
    %26 = vst [vmem:[#allocation5] sm:$0xff] %v25
    // Predicated region
    $region10: #{tpu_custom_call.1} parent=1 // pred_check
      _
    $region11: #{tpu_custom_call.1} parent=1 // pred_check_branch
      %28 = sbr.rel (0) target = $region13
    $region12: #{tpu_custom_call.1} parent=1 // pred_region
      %30 = vsyncadd [#allocation4], 0
      %s32 = sshll.u32 [#allocation5], 4
      %s33 = int_to_ptr.vmem [resolvable:$true] %s32
      %s34 = sshll.u32 %s1, 4
      %s35 = int_to_ptr.hbm [resolvable:$true] %s34
      %37 = dma.vmem_to_hbm [thread:$0]  %s33, 128, %s35, [#allocation4]
    $region13: #{tpu_custom_call.1} parent=1 // pred_fallthru
      _
    // Predicated region
    $region14: #{tpu_custom_call.1} parent=1 // pred_check
      _
    $region15: #{tpu_custom_call.1} parent=1 // pred_check_branch
      %39 = sbr.rel (0) target = $region17
    $region16: #{tpu_custom_call.1} parent=1 // pred_region
      %41 = dma.done [#allocation4], 128
    $region17: #{tpu_custom_call.1} parent=1 // pred_fallthru
      _
    %42 = vsyncpa [#allocation3], 1
    %43 = vsyncpa [#allocation4], 1

</llo_original>
